<compile_context>
chip_gen: v5e
topology: v5e:2x2
jax: 0.10.0
libtpu: 0.0.40
codegen_flags: <defaults>
</compile_context>

<pallas_src>
import functools

import jax
import jax.numpy as jnp
from jax.experimental import pallas as pl
from jax.experimental.pallas import tpu as pltpu


# ---------------------------------------------------------------------------
# Kernels
# ---------------------------------------------------------------------------
def se_fused_kernel(x_ref, w1t_ref, w2t_ref, o_ref, *, inv_hw):
    # x_ref:   (Bt, C, HWp)  input tile (native dtype, lane-dense, zero padded)
    # w1t_ref: (C, HIDDEN)   fc1 weight, transposed, f32
    # w2t_ref: (HIDDEN, C)   fc2 weight, transposed, f32
    # o_ref:   (Bt, C, HWp)  output tile
    # Global average pool (AdaptiveAvgPool2d(1)): f32 accumulation, divide by
    # the TRUE spatial size (padded lanes are zeros and only touch the sum).
    pool = jnp.sum(x_ref[...], axis=2, dtype=jnp.float32) * inv_hw   # (Bt, C)

    # fc1 (no bias) + ReLU: (Bt, C) @ (C, HIDDEN) -> (Bt, HIDDEN)
    hdn = jnp.maximum(
        jnp.dot(pool, w1t_ref[...], preferred_element_type=jnp.float32), 0.0)
    # fc2 (no bias) + Sigmoid: (Bt, HIDDEN) @ (HIDDEN, C) -> (Bt, C)
    s = jnp.dot(hdn, w2t_ref[...], preferred_element_type=jnp.float32)
    se = jax.nn.sigmoid(s).astype(o_ref.dtype)                        # (Bt, C)

    # Second streaming read of x; lane-dense store.  (Reading x_ref again
    # instead of reusing the pool-pass value keeps the tile's live range
    # short across the FC/sigmoid phase.)
    o_ref[...] = x_ref[...] * se[:, :, None]


def se_gate_kernel(x_ref, w1t_ref, w2t_ref, se_ref, acc_ref, *, inv_hw):
    # Fallback pass 1: pool over spatial chunks ('arbitrary' axis), then gate.
    # x_ref: (1, C, CHUNK); se_ref: (1, C, 1) f32; acc_ref: (1, C) f32 scratch.
    j = pl.program_id(1)

    @pl.when(j == 0)
    def _():
        acc_ref[...] = jnp.zeros_like(acc_ref)

    acc_ref[...] += jnp.sum(x_ref[...], axis=2, dtype=jnp.float32)

    @pl.when(j == pl.num_programs(1) - 1)
    def _():
        pool = acc_ref[...] * inv_hw                                  # (1, C)
        hdn = jnp.maximum(
            jnp.dot(pool, w1t_ref[...], preferred_element_type=jnp.float32),
            0.0)
        s = jnp.dot(hdn, w2t_ref[...], preferred_element_type=jnp.float32)
        se_ref[...] = jax.nn.sigmoid(s)[:, :, None]


def se_scale_kernel(x_ref, se_ref, o_ref):
    # Fallback pass 2: stream x and scale by the per-(b, c) gate.
    # x_ref: (1, C, CHUNK); se_ref: (1, C, 1) f32; o_ref: (1, C, CHUNK).
    o_ref[...] = x_ref[...] * se_ref[...].astype(o_ref.dtype)


# ---------------------------------------------------------------------------
# Sizing helpers
# ---------------------------------------------------------------------------
def _vmem_capacity_bytes():
    try:
        return int(pltpu.get_tpu_info().vmem_capacity_bytes)
    except Exception:
        return 64 << 20  # conservative: v7x per-TensorCore VMEM


def _vmem_limit(requirement, vmem_cap):
    # Generous scoped limit, but NEVER below the real requirement.
    limit = min(max(requirement, 32 << 20), int(0.9 * vmem_cap))
    return int(max(limit, requirement))


def _choose_batch_tile(b, row_bytes, target_block, max_block):
    """Largest divisor bt of b with bt*row_bytes <= max_block, preferring
    >= target_block, and capped at b//2 so the grid has >=2 parallel steps
    (v7x megacore) whenever b >= 2."""
    cap = b if b < 2 else max(b // 2, 1)
    best = 1
    for bt in range(1, cap + 1):
        if b % bt:
            continue
        if bt * row_bytes > max_block:
            break
        best = bt
        if bt * row_bytes >= target_block:
            break
    return best


# ---------------------------------------------------------------------------
# Wrapper
# ---------------------------------------------------------------------------
def se_attention(x, w1, w2):
    """x: (B, C, H, W); w1: (C//r, C); w2: (C, C//r)  (PyTorch nn.Linear weights)."""
    b, c, h, w = x.shape
    hw = h * w
    hidden = w1.shape[0]
    dtype = x.dtype
    itemsize = jnp.dtype(dtype).itemsize
    inv_hw = 1.0 / float(hw)

    # Lane-dense spatial axis: pad hw up to a multiple of 128.
    hw_pad = ((hw + 127) // 128) * 128
    x_flat = x.reshape(b, c, hw)
    if hw_pad != hw:
        x_flat = jnp.pad(x_flat, ((0, 0), (0, 0), (0, hw_pad - hw)))

    # Tiny weights: transpose + cast to f32 once in the wrapper.
    w1t = w1.T.astype(jnp.float32)                 # (C, HIDDEN)
    w2t = w2.T.astype(jnp.float32)                 # (HIDDEN, C)
    weight_bytes = (w1t.size + w2t.size) * 4

    # Generation-aware block budget: 2x-in + 2x-out double buffering.
    vmem_cap = _vmem_capacity_bytes()
    headroom = 4 << 20
    budget = int(0.75 * vmem_cap) - weight_bytes - headroom
    max_block = max(budget // 4, 1 << 20)
    target_block = min(8 << 20, max_block)

    row_bytes = c * hw_pad * itemsize

    cost = pl.CostEstimate(
        flops=int(4 * b * c * hidden + 2 * b * c * hw),
        transcendentals=int(b * c),
        bytes_accessed=int(2 * b * c * hw_pad * itemsize + weight_bytes),
    )

    if row_bytes <= max_block:
        # ------------------ fused single-pass path (common case) -----------
        bt = _choose_batch_tile(b, row_bytes, target_block, max_block)
        block_bytes = bt * row_bytes
        vmem_limit = _vmem_limit(4 * block_bytes + 2 * weight_bytes + headroom,
                                 vmem_cap)

        kernel = functools.partial(se_fused_kernel, inv_hw=inv_hw)
        out_flat = pl.pallas_call(
            kernel,
            out_shape=jax.ShapeDtypeStruct((b, c, hw_pad), dtype),
            grid_spec=pltpu.PrefetchScalarGridSpec(
                num_scalar_prefetch=0,
                grid=(b // bt,),
                in_specs=[
                    pl.BlockSpec((bt, c, hw_pad), lambda i: (i, 0, 0)),
                    pl.BlockSpec((c, hidden), lambda i: (0, 0)),
                    pl.BlockSpec((hidden, c), lambda i: (0, 0)),
                ],
                out_specs=pl.BlockSpec((bt, c, hw_pad), lambda i: (i, 0, 0)),
            ),
            compiler_params=pltpu.CompilerParams(
                dimension_semantics=("parallel",),
                vmem_limit_bytes=vmem_limit,
            ),
            cost_estimate=cost,
        )(x_flat, w1t, w2t)
    else:
        # ------------------ fallback: split the spatial axis ---------------
        # A single (C, HW) row exceeds the block budget (large feature maps on
        # the 64 MiB v7x VMEM).  Two passes over x: gate (reduction over
        # spatial chunks) then scale.  Never under-provision vmem_limit.
        lane_chunk = max((max_block // (c * itemsize)) // 128 * 128, 128)
        nchunks = pl.cdiv(hw_pad, lane_chunk)
        hw_pad2 = nchunks * lane_chunk
        if hw_pad2 != hw_pad:
            x_flat = jnp.pad(x_flat, ((0, 0), (0, 0), (0, hw_pad2 - hw_pad)))

        block_bytes = c * lane_chunk * itemsize
        vmem_limit = _vmem_limit(4 * block_bytes + 2 * weight_bytes + headroom,
                                 vmem_cap)

        gate_kernel = functools.partial(se_gate_kernel, inv_hw=inv_hw)
        se = pl.pallas_call(
            gate_kernel,
            out_shape=jax.ShapeDtypeStruct((b, c, 1), jnp.float32),
            grid_spec=pltpu.PrefetchScalarGridSpec(
                num_scalar_prefetch=0,
                grid=(b, nchunks),
                in_specs=[
                    pl.BlockSpec((1, c, lane_chunk), lambda i, j: (i, 0, j)),
                    pl.BlockSpec((c, hidden), lambda i, j: (0, 0)),
                    pl.BlockSpec((hidden, c), lambda i, j: (0, 0)),
                ],
                out_specs=pl.BlockSpec((1, c, 1), lambda i, j: (i, 0, 0)),
                scratch_shapes=[pltpu.VMEM((1, c), jnp.float32)],
            ),
            compiler_params=pltpu.CompilerParams(
                dimension_semantics=("parallel", "arbitrary"),
                vmem_limit_bytes=vmem_limit,
            ),
        )(x_flat, w1t, w2t)

        out_flat = pl.pallas_call(
            se_scale_kernel,
            out_shape=jax.ShapeDtypeStruct((b, c, hw_pad2), dtype),
            grid_spec=pltpu.PrefetchScalarGridSpec(
                num_scalar_prefetch=0,
                grid=(b, nchunks),
                in_specs=[
                    pl.BlockSpec((1, c, lane_chunk), lambda i, j: (i, 0, j)),
                    pl.BlockSpec((1, c, 1), lambda i, j: (i, 0, 0)),
                ],
                out_specs=pl.BlockSpec((1, c, lane_chunk), lambda i, j: (i, 0, j)),
            ),
            compiler_params=pltpu.CompilerParams(
                dimension_semantics=("parallel", "parallel"),
                vmem_limit_bytes=vmem_limit,
            ),
            cost_estimate=cost,
        )(x_flat, se)

    if out_flat.shape[2] != hw:
        out_flat = out_flat[:, :, :hw]
    return out_flat.reshape(b, c, h, w)


def se_attention_ref(x, w1, w2):
    """Pure-JAX reference mirroring the PyTorch forward."""
    pool = jnp.mean(x, axis=(2, 3))                      # (B, C)
    hdn = jnp.maximum(pool @ w1.T, 0.0)                  # (B, C//r)
    se = jax.nn.sigmoid(hdn @ w2.T)                      # (B, C)
    return x * se[:, :, None, None]


if __name__ == "__main__":
    # Small shapes consistent with the module: channel=64, reduction=8.
    B, C, H, W = 2, 64, 16, 16
    REDUCTION = 8
    HIDDEN = C // REDUCTION

    key = jax.random.PRNGKey(0)
    kx, k1, k2 = jax.random.split(key, 3)

    x = jax.random.normal(kx, (B, C, H, W), dtype=jnp.float32)
    # Deterministic synthetic weights (PyTorch nn.Linear weight shapes, no bias).
    w1 = jax.random.normal(k1, (HIDDEN, C), dtype=jnp.float32) * (1.0 / C) ** 0.5
    w2 = jax.random.normal(k2, (C, HIDDEN), dtype=jnp.float32) * (1.0 / HIDDEN) ** 0.5

    out = se_attention(x, w1, w2)
    out = jax.block_until_ready(out)

    ref = se_attention_ref(x, w1, w2)
    assert out.shape == (B, C, H, W)
    assert jnp.allclose(out, ref, atol=1e-5, rtol=1e-5), "mismatch vs reference"

    print("KERNEL_OK")
</pallas_src>

<mosaic_0001>
module attributes {stable_mosaic.version = 11 : i64} {
  func.func @se_fused_kernel(%arg0: i32, %arg1: memref<1x64x256xf32, #tpu.memory_space<vmem>>, %arg2: memref<64x8xf32, #tpu.memory_space<vmem>>, %arg3: memref<8x64xf32, #tpu.memory_space<vmem>>, %arg4: memref<1x64x256xf32, #tpu.memory_space<vmem>>) attributes {dimension_semantics = [#tpu.dimension_semantics<parallel>], iteration_bounds = array<i64: 2>, scalar_prefetch = 0 : i64, scratch_operands = 0 : i64, tpu.core_type = #tpu.core_type<tc>, window_params = [{transform_indices = @transform_0, window_bounds = array<i64: 1, 64, 256>}, {pipeline_mode = #tpu.pipeline_mode<synchronous>, transform_indices = @transform_1, window_bounds = array<i64: 64, 8>}, {pipeline_mode = #tpu.pipeline_mode<synchronous>, transform_indices = @transform_2, window_bounds = array<i64: 8, 64>}, {transform_indices = @transform_3, window_bounds = array<i64: 1, 64, 256>}]} {
    %c0 = arith.constant 0 : index
    %c0_0 = arith.constant 0 : index
    %c0_1 = arith.constant 0 : index
    %0 = vector.load %arg1[%c0, %c0_0, %c0_1] : memref<1x64x256xf32, #tpu.memory_space<vmem>>, vector<1x64x256xf32>
    %cst = arith.constant dense<0.000000e+00> : vector<1x64xf32>
    %1 = vector.multi_reduction <add>, %0, %cst [2] : vector<1x64x256xf32> to vector<1x64xf32>
    %cst_2 = arith.constant 3.906250e-03 : f32
    %2 = vector.broadcast %cst_2 : f32 to vector<1x64xf32>
    %3 = arith.mulf %1, %2 : vector<1x64xf32>
    %c0_3 = arith.constant 0 : index
    %c0_4 = arith.constant 0 : index
    %4 = vector.load %arg2[%c0_3, %c0_4] : memref<64x8xf32, #tpu.memory_space<vmem>>, vector<64x8xf32>
    %cst_5 = arith.constant dense<0.000000e+00> : vector<1x8xf32>
    %5 = tpu.matmul %3, %4, %cst_5 {dimension_numbers = #tpu.dot_dimension_numbers<[1], [0], [0], [1], [0, 0, 1, 1], [], []>} : vector<1x64xf32>, vector<64x8xf32>, vector<1x8xf32> -> vector<1x8xf32>
    %cst_6 = arith.constant 0.000000e+00 : f32
    %6 = vector.broadcast %cst_6 : f32 to vector<1x8xf32>
    %7 = arith.maximumf %5, %6 : vector<1x8xf32>
    %c0_7 = arith.constant 0 : index
    %c0_8 = arith.constant 0 : index
    %8 = vector.load %arg3[%c0_7, %c0_8] : memref<8x64xf32, #tpu.memory_space<vmem>>, vector<8x64xf32>
    %cst_9 = arith.constant dense<0.000000e+00> : vector<1x64xf32>
    %9 = tpu.matmul %7, %8, %cst_9 {dimension_numbers = #tpu.dot_dimension_numbers<[1], [0], [0], [1], [0, 0, 1, 1], [], []>} : vector<1x8xf32>, vector<8x64xf32>, vector<1x64xf32> -> vector<1x64xf32>
    %10 = arith.negf %9 : vector<1x64xf32>
    %11 = math.exp %10 : vector<1x64xf32>
    %cst_10 = arith.constant 1.000000e+00 : f32
    %12 = vector.broadcast %cst_10 : f32 to vector<1x64xf32>
    %13 = arith.addf %12, %11 : vector<1x64xf32>
    %14 = arith.divf %12, %13 : vector<1x64xf32>
    %c0_11 = arith.constant 0 : index
    %c0_12 = arith.constant 0 : index
    %c0_13 = arith.constant 0 : index
    %15 = vector.load %arg1[%c0_11, %c0_12, %c0_13] : memref<1x64x256xf32, #tpu.memory_space<vmem>>, vector<1x64x256xf32>
    %16 = vector.shape_cast %14 : vector<1x64xf32> to vector<1x64x1xf32>
    %17 = vector.broadcast %16 : vector<1x64x1xf32> to vector<1x64x256xf32>
    %18 = arith.mulf %15, %17 : vector<1x64x256xf32>
    %c0_14 = arith.constant 0 : index
    %c0_15 = arith.constant 0 : index
    %c0_16 = arith.constant 0 : index
    %19 = vector.load %arg4[%c0_14, %c0_15, %c0_16] : memref<1x64x256xf32, #tpu.memory_space<vmem>>, vector<1x64x256xf32>
    tpu.vector_store %arg4[%c0_14, %c0_15, %c0_16], %18 {strides = array<i32>} : memref<1x64x256xf32, #tpu.memory_space<vmem>>, vector<1x64x256xf32>,
    return
  }
  func.func @transform_0(%arg0: i32) -> (i32, i32, i32) {
    %c0_i32 = arith.constant 0 : i32
    %c0_i32_0 = arith.constant 0 : i32
    %c0_i32_1 = arith.constant 0 : i32
    return %arg0, %c0_i32, %c0_i32_0 : i32, i32, i32
  }
  func.func @transform_1(%arg0: i32) -> (i32, i32) {
    %c0_i32 = arith.constant 0 : i32
    %c0_i32_0 = arith.constant 0 : i32
    %c0_i32_1 = arith.constant 0 : i32
    return %c0_i32, %c0_i32_0 : i32, i32
  }
  func.func @transform_2(%arg0: i32) -> (i32, i32) {
    %c0_i32 = arith.constant 0 : i32
    %c0_i32_0 = arith.constant 0 : i32
    %c0_i32_1 = arith.constant 0 : i32
    return %c0_i32, %c0_i32_0 : i32, i32
  }
  func.func @transform_3(%arg0: i32) -> (i32, i32, i32) {
    %c0_i32 = arith.constant 0 : i32
    %c0_i32_0 = arith.constant 0 : i32
    %c0_i32_1 = arith.constant 0 : i32
    return %arg0, %c0_i32, %c0_i32_0 : i32, i32, i32
  }
}

</mosaic_0001>

<llo_original>
// kernel: tpu_custom_call.1
$region0: #{tpu_custom_call.1}
  #allocation0 [shape = 'u32[]', space=smem, size = 0x4, offset = 0x4, fixed_abs, tag = 'smem constant byte address 0x4 - core index']
  #allocation1 [shape = 'u32[72,128]{1,0:T(1,128)}', space=vmem, size = 0x9000, scoped, tag = 'internal scratch']
  %s0 = inlined_call_operand.hbm [shape: f32[2,64,256], index: 0, kind: input, shape index: {}]
  %s1 = inlined_call_operand.vmem [shape: f32[64,8], index: 1, kind: input, shape index: {}]
  %s2 = inlined_call_operand.vmem [shape: f32[8,64], index: 2, kind: input, shape index: {}]
  %s3 = inlined_call_operand.hbm [shape: f32[2,64,256], index: 3, kind: output, shape index: {}]
  %s4 = sld [smem:[#allocation0]]
  $region49: #{tpu_custom_call.1} parent=0
    _
  %s6 = ssub.s32 1, %s4
  %s7 = scalar_select 0, %s6, %s4
  $region1: #{tpu_custom_call.1} parent=0
    #allocation2 [shape = 'u8[131072]{0}', space=vmem, size = 0x20000, scoped, tag = 'input window, operand 0']
    #allocation3 [shape = 's32[2]{0}', space=sflag, size = 0x8, scoped, tag = 'scoped memory for tpu_custom_call.1']
    #allocation4 [shape = 's32[2]{0}', space=sflag, size = 0x8, scoped, tag = 'scoped memory for tpu_custom_call.1']
    #allocation5 [shape = 'u8[131072]{0}', space=vmem, size = 0x20000, scoped, tag = 'output window, operand 0']
    %8 = vsyncpa [#allocation3], 0
    %s9 = scalar_lea.sflag [#allocation3], 1
    %10 = vsyncpa %s9, 0
    %11 = vsyncpa [#allocation4], 0
    %s12 = scalar_lea.sflag [#allocation4], 1
    %13 = vsyncpa %s12, 0
    loop: start=0, step=1, limit=4
    $region2: #{tpu_custom_call.1} parent=1 // loop_pre_header
      _
    $region3: #{tpu_custom_call.1} parent=1 // loop_header
      %s15 = sphi 0, %s19
      %p16 = scmp.ge.s32.totalorder %s15, 4
      %s25 = sphi 0, %s27
      %s28 = sphi 0, %s25
      %s29 = sphi 0, %s28
      %s45 = sphi 0, %s29
      %s49 = sphi 0, %s49
      %s51 = sphi 0, %s49
      %s52 = sphi 0, %s51
      %s66 = sphi 0, %s52
      %s70 = sphi 0, %s70
      %s72 = sphi 0, %s70
      %s73 = sphi 0, %s72
      %s87 = sphi 0, %s73
      %s93 = sphi 0, %s95
      %s96 = sphi 0, %s93
      %s97 = sphi 0, %s96
      %s113 = sphi 0, %s97
    $region4: #{tpu_custom_call.1} parent=1 // loop_header_branch
      %18 = sbr.rel (%p16) target = $region8
    $region5: #{tpu_custom_call.1} parent=1 // loop_body
      %s20 = ssub.s32 %s15, 1
      %s21 = ssub.s32 %s15, 2
      %s22 = sadd.s32 %s15, 1
      %s23 = ssub.s32 %s15, %s22
      %p24 = scmp.eq.s32.totalorder %s23, 0
      %s26 = sadd.s32 %s25, 1
      %s27 = scalar_select %p24, %s25, %s26
      %p30 = pneg %p24
      %p31 = scmp.eq.s32.totalorder %s15, 1
      %p32 = por %p30, %p31
      %p33 = scmp.ne.s32.totalorder %s25, %s28
      %p34 = scmp.eq.s32.totalorder %s15, 0
      %p35 = por %p33, %p34
      %p36 = scmp.ne.s32.totalorder %s25, %s28
      %p37 = scmp.eq.s32.totalorder %s20, 1
      %p38 = por %p36, %p37
      %p39 = scmp.ne.s32.totalorder %s28, %s29
      %p40 = scmp.eq.s32.totalorder %s20, 0
      %p41 = por %p39, %p40
      %p42 = scmp.ne.s32.totalorder %s28, %s29
      %p43 = scmp.eq.s32.totalorder %s21, 1
      %p44 = por %p42, %p43
      %p46 = scmp.ne.s32.totalorder %s29, %s45
      %p47 = scmp.eq.s32.totalorder %s21, 0
      %p48 = por %p46, %p47
      %s50 = sadd.s32 %s49, 1
      %p53 = scmp.eq.s32.totalorder %s15, 1
      %p54 = scmp.ne.s32.totalorder %s49, %s51
      %p55 = scmp.eq.s32.totalorder %s15, 0
      %p56 = por %p54, %p55
      %p57 = scmp.ne.s32.totalorder %s49, %s51
      %p58 = scmp.eq.s32.totalorder %s20, 1
      %p59 = por %p57, %p58
      %p60 = scmp.ne.s32.totalorder %s51, %s52
      %p61 = scmp.eq.s32.totalorder %s20, 0
      %p62 = por %p60, %p61
      %p63 = scmp.ne.s32.totalorder %s51, %s52
      %p64 = scmp.eq.s32.totalorder %s21, 1
      %p65 = por %p63, %p64
      %p67 = scmp.ne.s32.totalorder %s52, %s66
      %p68 = scmp.eq.s32.totalorder %s21, 0
      %p69 = por %p67, %p68
      %s71 = sadd.s32 %s70, 1
      %p74 = scmp.eq.s32.totalorder %s15, 1
      %p75 = scmp.ne.s32.totalorder %s70, %s72
      %p76 = scmp.eq.s32.totalorder %s15, 0
      %p77 = por %p75, %p76
      %p78 = scmp.ne.s32.totalorder %s70, %s72
      %p79 = scmp.eq.s32.totalorder %s20, 1
      %p80 = por %p78, %p79
      %p81 = scmp.ne.s32.totalorder %s72, %s73
      %p82 = scmp.eq.s32.totalorder %s20, 0
      %p83 = por %p81, %p82
      %p84 = scmp.ne.s32.totalorder %s72, %s73
      %p85 = scmp.eq.s32.totalorder %s21, 1
      %p86 = por %p84, %p85
      %p88 = scmp.ne.s32.totalorder %s73, %s87
      %p89 = scmp.eq.s32.totalorder %s21, 0
      %p90 = por %p88, %p89
      %s91 = ssub.s32 %s15, %s22
      %p92 = scmp.eq.s32.totalorder %s91, 0
      %s94 = sadd.s32 %s93, 1
      %s95 = scalar_select %p92, %s93, %s94
      %p98 = pneg %p92
      %p99 = scmp.eq.s32.totalorder %s15, 1
      %p100 = por %p98, %p99
      %p101 = scmp.ne.s32.totalorder %s93, %s96
      %p102 = scmp.eq.s32.totalorder %s15, 0
      %p103 = por %p101, %p102
      %p104 = scmp.ne.s32.totalorder %s93, %s96
      %p105 = scmp.eq.s32.totalorder %s20, 1
      %p106 = por %p104, %p105
      %p107 = scmp.ne.s32.totalorder %s96, %s97
      %p108 = scmp.eq.s32.totalorder %s20, 0
      %p109 = por %p107, %p108
      %p110 = scmp.ne.s32.totalorder %s96, %s97
      %p111 = scmp.eq.s32.totalorder %s21, 1
      %p112 = por %p110, %p111
      %p114 = scmp.ne.s32.totalorder %s97, %s113
      %p115 = scmp.eq.s32.totalorder %s21, 0
      %p116 = por %p114, %p115
      %p117 = scmp.le.s32.totalorder 1, %s15
      %p118 = scmp.lt.s32.totalorder %s15, 3
      %p119 = pnand %p117, %p118
      %p120 = pneg %p119
      // Predicated region
      $region9: #{tpu_custom_call.1} parent=5 // pred_check
        _
      $region10: #{tpu_custom_call.1} parent=5 // pred_check_branch
        %122 = sbr.rel (%p119) target = $region12
      $region11: #{tpu_custom_call.1} parent=5 // pred_region
        %s123 = ssub.s32 %s15, 1
        // Predicated region
        $region13: #{tpu_custom_call.1} parent=11 // pred_check
          %p124 = pneg %p62
        $region14: #{tpu_custom_call.1} parent=11 // pred_check_branch
          %126 = sbr.rel (%p124) target = $region16
        $region15: #{tpu_custom_call.1} parent=11 // pred_region
          _
        $region16: #{tpu_custom_call.1} parent=11 // pred_fallthru
          _
        // Predicated region
        $region17: #{tpu_custom_call.1} parent=11 // pred_check
          %p127 = pneg %p83
        $region18: #{tpu_custom_call.1} parent=11 // pred_check_branch
          %129 = sbr.rel (%p127) target = $region20
        $region19: #{tpu_custom_call.1} parent=11 // pred_region
          _
        $region20: #{tpu_custom_call.1} parent=11 // pred_fallthru
          _
      $region12: #{tpu_custom_call.1} parent=5 // pred_fallthru
        _
      %p130 = scmp.lt.s32.totalorder %s15, 2
      // Predicated region
      $region21: #{tpu_custom_call.1} parent=5 // pred_check
        %p131 = pneg %p130
      $region22: #{tpu_custom_call.1} parent=5 // pred_check_branch
        %133 = sbr.rel (%p131) target = $region24
      $region23: #{tpu_custom_call.1} parent=5 // pred_region
        // Predicated region
        $region25: #{tpu_custom_call.1} parent=23 // pred_check
          %p134 = pneg %p35
        $region26: #{tpu_custom_call.1} parent=23 // pred_check_branch
          %136 = sbr.rel (%p134) target = $region28
        $region27: #{tpu_custom_call.1} parent=23 // pred_region
          %s137 = sand.u32 %s25, 1
          %s138 = scalar_lea.sflag [#allocation3], %s137
          %s139 = sand.u32 %s25, 1
          %s140 = smul.addr %s139, 128
          %s141 = scalar_lea.vmem [#allocation2], %s140
          %143 = vsyncadd %s138, 0
          %s144 = smul.addr %s15, 16
          %s145 = smul.addr %s144, 8
          %s146 = scalar_lea.hbm %s0, %s145
          %s147 = sshll.u32 %s146, 4
          %s148 = int_to_ptr.hbm [resolvable:$true] %s147
          %s149 = sshll.u32 %s141, 4
          %s150 = int_to_ptr.vmem [resolvable:$true] %s149
          %155 = dma.hbm_to_vmem [thread:$0]  %s148, 2048, %s150, %s138, 256, 256, 16
        $region28: #{tpu_custom_call.1} parent=23 // pred_fallthru
          _
      $region24: #{tpu_custom_call.1} parent=5 // pred_fallthru
        _
      %p156 = scmp.le.s32.totalorder 1, %s15
      %p157 = scmp.lt.s32.totalorder %s15, 3
      %p158 = pnand %p156, %p157
      %p159 = pneg %p158
      // Predicated region
      $region29: #{tpu_custom_call.1} parent=5 // pred_check
        _
      $region30: #{tpu_custom_call.1} parent=5 // pred_check_branch
        %161 = sbr.rel (%p158) target = $region32
      $region31: #{tpu_custom_call.1} parent=5 // pred_region
        %s162 = ssub.s32 %s15, 1
        %s163 = sand.u32 %s28, 1
        %s164 = scalar_lea.sflag [#allocation3], %s163
        %s165 = sand.u32 %s28, 1
        %s166 = smul.addr %s165, 128
        %s167 = scalar_lea.vmem [#allocation2], %s166
        // Predicated region
        $region33: #{tpu_custom_call.1} parent=31 // pred_check
          %p168 = pneg %p41
        $region34: #{tpu_custom_call.1} parent=31 // pred_check_branch
          %170 = sbr.rel (%p168) target = $region36
        $region35: #{tpu_custom_call.1} parent=31 // pred_region
          %172 = dma.done %s164, 2048
        $region36: #{tpu_custom_call.1} parent=31 // pred_fallthru
          _
        %s173 = sand.u32 %s28, 1
        %s174 = scalar_lea.sflag [#allocation3], %s173
        %s175 = sand.u32 %s28, 1
        %s176 = smul.addr %s175, 128
        %s177 = scalar_lea.vmem [#allocation2], %s176
        %p178 = pneg %p41
        %p179 = pneg %p38
        %p180 = pneg %p62
        %p181 = pneg %p59
        %p182 = pneg %p83
        %p183 = pneg %p80
        %p184 = pneg %p109
        %p185 = pneg %p106
        %s186 = sand.u32 %s96, 1
        %s187 = scalar_lea.sflag [#allocation4], %s186
        %s188 = sand.u32 %s96, 1
        %s189 = smul.addr %s188, 128
        %s190 = scalar_lea.vmem [#allocation5], %s189
        %v191 = vld [vmem:[%s167] sm:$0xff]
        %v192 = vld [vmem:[%s167 + $0x8] sm:$0xff]
        %v193 = vld [vmem:[%s167 + $0x10] sm:$0xff]
        %v194 = vld [vmem:[%s167 + $0x18] sm:$0xff]
        %v195 = vld [vmem:[%s167 + $0x20] sm:$0xff]
        %v196 = vld [vmem:[%s167 + $0x28] sm:$0xff]
        %v197 = vld [vmem:[%s167 + $0x30] sm:$0xff]
        %v198 = vld [vmem:[%s167 + $0x38] sm:$0xff]
        %v199 = vld [vmem:[%s167 + $0x40] sm:$0xff]
        %v200 = vld [vmem:[%s167 + $0x48] sm:$0xff]
        %v201 = vld [vmem:[%s167 + $0x50] sm:$0xff]
        %v202 = vld [vmem:[%s167 + $0x58] sm:$0xff]
        %v203 = vld [vmem:[%s167 + $0x60] sm:$0xff]
        %v204 = vld [vmem:[%s167 + $0x68] sm:$0xff]
        %v205 = vld [vmem:[%s167 + $0x70] sm:$0xff]
        %v206 = vld [vmem:[%s167 + $0x78] sm:$0xff]
        %v207 = vadd.f32 %v191, %v192
        %208 = vadd.xlane.f32.xlu0 %v207
        %v209 = vpop.xlane.xlu0 %208
        %v210 = vadd.f32 %v193, %v194
        %211 = vadd.xlane.f32.xlu0 %v210
        %v212 = vpop.xlane.xlu0 %211
        %v213 = vadd.f32 %v195, %v196
        %214 = vadd.xlane.f32.xlu0 %v213
        %v215 = vpop.xlane.xlu0 %214
        %v216 = vadd.f32 %v197, %v198
        %217 = vadd.xlane.f32.xlu0 %v216
        %v218 = vpop.xlane.xlu0 %217
        %v219 = vadd.f32 %v199, %v200
        %220 = vadd.xlane.f32.xlu0 %v219
        %v221 = vpop.xlane.xlu0 %220
        %v222 = vadd.f32 %v201, %v202
        %223 = vadd.xlane.f32.xlu0 %v222
        %v224 = vpop.xlane.xlu0 %223
        %v225 = vadd.f32 %v203, %v204
        %226 = vadd.xlane.f32.xlu0 %v225
        %v227 = vpop.xlane.xlu0 %226
        %v228 = vadd.f32 %v205, %v206
        %229 = vadd.xlane.f32.xlu0 %v228
        %v230 = vpop.xlane.xlu0 %229
        %v231 = vmul.f32 %v209, 0.00390625
        %v232 = vmul.f32 %v212, 0.00390625
        %v233 = vmul.f32 %v215, 0.00390625
        %v234 = vmul.f32 %v218, 0.00390625
        %v235 = vmul.f32 %v221, 0.00390625
        %v236 = vmul.f32 %v224, 0.00390625
        %v237 = vmul.f32 %v227, 0.00390625
        %v238 = vmul.f32 %v230, 0.00390625
        %v239 = vld [vmem:[%s1] sm:$0xff]
        %v240 = vld [vmem:[%s1 + $0x8] sm:$0xff]
        %v241 = vld [vmem:[%s1 + $0x10] sm:$0xff]
        %v242 = vld [vmem:[%s1 + $0x18] sm:$0xff]
        %v243 = vld [vmem:[%s1 + $0x20] sm:$0xff]
        %v244 = vld [vmem:[%s1 + $0x28] sm:$0xff]
        %v245 = vld [vmem:[%s1 + $0x30] sm:$0xff]
        %v246 = vld [vmem:[%s1 + $0x38] sm:$0xff]
        %v255 = vlaneseq
        %v256 = vand.u32 %v255, 127
        %v257 = vperm.slane %v231, %v256
        %v258 = vadd.s32 %v256, 4294967288
        %v259 = vperm.slane %v232, %v258
        %vm260 = vcmask 130112
        %v261 = vsel %vm260, %v259, %v257
        %v262 = vadd.s32 %v256, 4294967280
        %v263 = vperm.slane %v233, %v262
        %vm264 = vcmask 195712
        %v265 = vsel %vm264, %v263, %v261
        %v266 = vadd.s32 %v256, 4294967272
        %v267 = vperm.slane %v234, %v266
        %vm268 = vcmask 261312
        %v269 = vsel %vm268, %v267, %v265
        %v270 = vadd.s32 %v256, 4294967264
        %v271 = vperm.slane %v235, %v270
        %vm272 = vcmask 326912
        %v273 = vsel %vm272, %v271, %v269
        %v274 = vadd.s32 %v256, 4294967256
        %v275 = vperm.slane %v236, %v274
        %vm276 = vcmask 392512
        %v277 = vsel %vm276, %v275, %v273
        %v278 = vadd.s32 %v256, 4294967248
        %v279 = vperm.slane %v237, %v278
        %vm280 = vcmask 458112
        %v281 = vsel %vm280, %v279, %v277
        %v282 = vadd.s32 %v256, 4294967240
        %v283 = vperm.slane %v238, %v282
        %vm284 = vcmask 523712
        %v285 = vsel %vm284, %v283, %v281
        %vm286 = vcmask 523264
        %v287 = vsel %vm286, %v285, 0
        %289 = vmatpush.msra.mxu0 0.0
        %290 = vmatpush.msra.mxu0 0.0
        %291 = vmatpush.msra.mxu0 0.0
        %292 = vmatpush.msra.mxu0 0.0
        %293 = vmatpush.msra.mxu0 0.0
        %294 = vmatpush.msra.mxu0 0.0
        %295 = vmatpush.msra.mxu0 0.0
        %296 = vmatpush.msra.mxu0 0.0
        %297 = vmatpush.msra.mxu0 %v246
        %298 = vmatpush.msra.mxu0 %v245
        %299 = vmatpush.msra.mxu0 %v244
        %300 = vmatpush.msra.mxu0 %v243
        %301 = vmatpush.msra.mxu0 %v242
        %302 = vmatpush.msra.mxu0 %v241
        %303 = vmatpush.msra.mxu0 %v240
        %304 = vmatpush.msra.mxu0 %v239
        %305 = vmatmul.f32.gmra.mxu0 %v287
        %v306 = vpop.f32.mrf.mxu0
        %v307 = vadd.f32 0.0, %v306
        %308 = vdwg.mxu0
        %v309 = vmax.f32 %v307, 0.0
        %v310 = vld [vmem:[%s2] sm:$0xff]
        %vm311 = vcmask 64512
        %v313 = vsel %vm311, %v309, 0
        %315 = vmatpush.msra.mxu0 0.0
        %316 = vmatpush.msra.mxu0 0.0
        %317 = vmatpush.msra.mxu0 0.0
        %318 = vmatpush.msra.mxu0 0.0
        %319 = vmatpush.msra.mxu0 0.0
        %320 = vmatpush.msra.mxu0 0.0
        %321 = vmatpush.msra.mxu0 0.0
        %322 = vmatpush.msra.mxu0 0.0
        %323 = vmatpush.msra.mxu0 0.0
        %324 = vmatpush.msra.mxu0 0.0
        %325 = vmatpush.msra.mxu0 0.0
        %326 = vmatpush.msra.mxu0 0.0
        %327 = vmatpush.msra.mxu0 0.0
        %328 = vmatpush.msra.mxu0 0.0
        %329 = vmatpush.msra.mxu0 0.0
        %330 = vmatpush.msra.mxu0 %v310
        %331 = vmatmul.f32.gmra.mxu0 %v313
        %v332 = vpop.f32.mrf.mxu0
        %v333 = vadd.f32 0.0, %v332
        %334 = vdwg.mxu0
        %v335 = vxor.u32 %v333, 2147483648
        %v336 = vmul.f32 %v335, 1.442695
        %v337 = vpow.pop %v336
        %v338 = vadd.f32 %v337, 1.0
        %v339 = vrcp.pop %v338
        %v340 = vmul.f32 %v338, %v339
        %v341 = vsub.f32 1.0, %v340
        %v342 = vmul.f32 %v339, %v341
        %v343 = vadd.f32 %v339, %v342
        %vm344 = vweird.f32 %v338
        %vm345 = vweird.f32 %v339
        %vm346 = vmor %vm344, %vm345
        %v347 = vsel %vm346, %v339, %v343
        %v348 = vand.u32 2147483647, %v338
        %vm349 = vcmp.eq.f32.partialorder %v348, 8.507059e+37
        %v350 = vand.u32 %v338, 2147483648
        %v351 = vor.u32 1.1754944e-38, %v350
        %v352 = vsel %vm349, %v351, %v347
        %v353 = vmul.f32 1.0, %v352
        %v354 = vperm.slane %v353, 0
        %v355 = vlaneseq
        %v356 = vshrl.u32 %v355, 7
        %358 = vset.pattern.permute.xlu0 %v356
        %359 = vperm.xlu0 %358, %v354
        %v360 = vpop.permute.xlu0 %359
        %v361 = vlaneseq
        %v362 = vshrl.u32 %v361, 7
        %v363 = vadd.s32 %v362, 8
        %364 = vset.pattern.permute.xlu0 %v363
        %365 = vperm.xlu0 %364, %v354
        %v366 = vpop.permute.xlu0 %365
        %v367 = vlaneseq
        %v368 = vshrl.u32 %v367, 7
        %v369 = vadd.s32 %v368, 16
        %370 = vset.pattern.permute.xlu0 %v369
        %371 = vperm.xlu0 %370, %v354
        %v372 = vpop.permute.xlu0 %371
        %v373 = vlaneseq
        %v374 = vshrl.u32 %v373, 7
        %v375 = vadd.s32 %v374, 24
        %376 = vset.pattern.permute.xlu0 %v375
        %377 = vperm.xlu0 %376, %v354
        %v378 = vpop.permute.xlu0 %377
        %v379 = vlaneseq
        %v380 = vshrl.u32 %v379, 7
        %v381 = vadd.s32 %v380, 32
        %382 = vset.pattern.permute.xlu0 %v381
        %383 = vperm.xlu0 %382, %v354
        %v384 = vpop.permute.xlu0 %383
        %v385 = vlaneseq
        %v386 = vshrl.u32 %v385, 7
        %v387 = vadd.s32 %v386, 40
        %388 = vset.pattern.permute.xlu0 %v387
        %389 = vperm.xlu0 %388, %v354
        %v390 = vpop.permute.xlu0 %389
        %v391 = vlaneseq
        %v392 = vshrl.u32 %v391, 7
        %v393 = vadd.s32 %v392, 48
        %394 = vset.pattern.permute.xlu0 %v393
        %395 = vperm.xlu0 %394, %v354
        %v396 = vpop.permute.xlu0 %395
        %v397 = vlaneseq
        %v398 = vshrl.u32 %v397, 7
        %v399 = vadd.s32 %v398, 56
        %400 = vset.pattern.permute.xlu0 %v399
        %401 = vperm.xlu0 %400, %v354
        %v402 = vpop.permute.xlu0 %401
        %v403 = vmul.f32 %v191, %v360
        %v404 = vmul.f32 %v192, %v360
        %v405 = vmul.f32 %v193, %v366
        %v406 = vmul.f32 %v194, %v366
        %v407 = vmul.f32 %v195, %v372
        %v408 = vmul.f32 %v196, %v372
        %v409 = vmul.f32 %v197, %v378
        %v410 = vmul.f32 %v198, %v378
        %v411 = vmul.f32 %v199, %v384
        %v412 = vmul.f32 %v200, %v384
        %v413 = vmul.f32 %v201, %v390
        %v414 = vmul.f32 %v202, %v390
        %v415 = vmul.f32 %v203, %v396
        %v416 = vmul.f32 %v204, %v396
        %v417 = vmul.f32 %v205, %v402
        %v418 = vmul.f32 %v206, %v402
        %419 = vst [vmem:[%s190] sm:$0xff] %v403
        %420 = vst [vmem:[%s190 + $0x8] sm:$0xff] %v404
        %421 = vst [vmem:[%s190 + $0x10] sm:$0xff] %v405
        %422 = vst [vmem:[%s190 + $0x18] sm:$0xff] %v406
        %423 = vst [vmem:[%s190 + $0x20] sm:$0xff] %v407
        %424 = vst [vmem:[%s190 + $0x28] sm:$0xff] %v408
        %425 = vst [vmem:[%s190 + $0x30] sm:$0xff] %v409
        %426 = vst [vmem:[%s190 + $0x38] sm:$0xff] %v410
        %427 = vst [vmem:[%s190 + $0x40] sm:$0xff] %v411
        %428 = vst [vmem:[%s190 + $0x48] sm:$0xff] %v412
        %429 = vst [vmem:[%s190 + $0x50] sm:$0xff] %v413
        %430 = vst [vmem:[%s190 + $0x58] sm:$0xff] %v414
        %431 = vst [vmem:[%s190 + $0x60] sm:$0xff] %v415
        %432 = vst [vmem:[%s190 + $0x68] sm:$0xff] %v416
        %433 = vst [vmem:[%s190 + $0x70] sm:$0xff] %v417
        %434 = vst [vmem:[%s190 + $0x78] sm:$0xff] %v418
        %s435 = sand.u32 %s96, 1
        %s436 = scalar_lea.sflag [#allocation4], %s435
        %s437 = sand.u32 %s96, 1
        %s438 = smul.addr %s437, 128
        %s439 = scalar_lea.vmem [#allocation5], %s438
        // Predicated region
        $region37: #{tpu_custom_call.1} parent=31 // pred_check
          %p440 = pneg %p106
        $region38: #{tpu_custom_call.1} parent=31 // pred_check_branch
          %442 = sbr.rel (%p440) target = $region40
        $region39: #{tpu_custom_call.1} parent=31 // pred_region
          %444 = vsyncadd %s436, 0
          %s445 = smul.addr %s20, 16
          %s446 = smul.addr %s445, 8
          %s447 = scalar_lea.hbm %s3, %s446
          %s448 = sshll.u32 %s439, 4
          %s449 = int_to_ptr.vmem [resolvable:$true] %s448
          %s450 = sshll.u32 %s447, 4
          %s451 = int_to_ptr.hbm [resolvable:$true] %s450
          %456 = dma.vmem_to_hbm [thread:$0]  %s449, 2048, %s451, %s436, 256, 256, 16
        $region40: #{tpu_custom_call.1} parent=31 // pred_fallthru
          _
      $region32: #{tpu_custom_call.1} parent=5 // pred_fallthru
        _
      %p457 = scmp.le.s32.totalorder 2, %s15
      // Predicated region
      $region41: #{tpu_custom_call.1} parent=5 // pred_check
        %p458 = pneg %p457
      $region42: #{tpu_custom_call.1} parent=5 // pred_check_branch
        %460 = sbr.rel (%p458) target = $region44
      $region43: #{tpu_custom_call.1} parent=5 // pred_region
        %s461 = ssub.s32 %s15, 2
        // Predicated region
        $region45: #{tpu_custom_call.1} parent=43 // pred_check
          %p462 = pneg %p112
        $region46: #{tpu_custom_call.1} parent=43 // pred_check_branch
          %464 = sbr.rel (%p462) target = $region48
        $region47: #{tpu_custom_call.1} parent=43 // pred_region
          %s465 = sand.u32 %s97, 1
          %s466 = scalar_lea.sflag [#allocation4], %s465
          %s467 = sand.u32 %s97, 1
          %s468 = smul.addr %s467, 128
          %s469 = scalar_lea.vmem [#allocation5], %s468
          %471 = dma.done %s466, 2048
        $region48: #{tpu_custom_call.1} parent=43 // pred_fallthru
          _
      $region44: #{tpu_custom_call.1} parent=5 // pred_fallthru
        _
    $region6: #{tpu_custom_call.1} parent=1 // loop_footer
      %s19 = sadd.s32 1, %s15
    $region7: #{tpu_custom_call.1} parent=1 // loop_footer_branch
      %14 = sbr.rel target = $region3
    $region8: #{tpu_custom_call.1} parent=1 // loop_exit
      _
    %472 = vsyncpa [#allocation3], 1
    %s473 = scalar_lea.sflag [#allocation3], 1
    %474 = vsyncpa %s473, 1
    %475 = vsyncpa [#allocation4], 1
    %s476 = scalar_lea.sflag [#allocation4], 1
    %477 = vsyncpa %s476, 1

</llo_original>
